<compile_context>
chip_gen: v5e
topology: v5e:2x2
jax: 0.10.0
libtpu: 0.0.40
codegen_flags: <defaults>
</compile_context>

<pallas_src>
import math
import numpy as np
import jax
import jax.numpy as jnp
from jax.experimental import pallas as pl
from jax.experimental.pallas import tpu as pltpu

NUM_BRANCHES = 3

# Cap on how many batch elements are folded into one grid step.  The per
# element excitation MLP is an unrolled sequence of 2*NB tiny MXU matmuls; at
# ~8 elements its cost is still hidden under the block's input DMA, beyond
# that it would start to dominate a memory-bound kernel.
MAX_BLOCK_BATCH = 8


# ----------------------------------------------------------------------------
# DCT filter construction (host-side, matches DCTLayer.get_dct_filter).
# With a single (u, v) component per branch the filter is identical across all
# channels of that branch, so only the flattened 2D spatial filter is kept.
# ----------------------------------------------------------------------------
def _build_filter(pos, freq, POS):
    result = math.cos(math.pi * freq * (pos + 0.5) / POS) / math.sqrt(POS)
    if freq == 0:
        return result
    return result * math.sqrt(2)


def make_dct_filters(H, W, components):
    """components: list of (u, v). Returns (NUM_BRANCHES, H*W) float32."""
    filts = []
    for (u, v) in components:
        f = np.zeros((H, W), dtype=np.float32)
        for tx in range(H):
            for ty in range(W):
                f[tx, ty] = _build_filter(tx, u, H) * _build_filter(ty, v, W)
        filts.append(f.reshape(-1))
    return jnp.asarray(np.stack(filts, axis=0))


# ----------------------------------------------------------------------------
# Hardware query (generation-aware block sizing / VMEM limit).
# ----------------------------------------------------------------------------
def _tpu_vmem_and_cores():
    """Returns (vmem_capacity_bytes, tensorcores_per_device), with safe
    fallbacks (64 MiB / 1 core) if the query is unavailable."""
    vmem = 64 * 1024 * 1024          # safe lower bound across v5e/v6e/v7x
    cores = 1
    try:
        info = pltpu.get_tpu_info()
        v = getattr(info, "vmem_capacity_bytes", None)
        if v:
            vmem = int(v)
        for attr in ("num_tensorcores", "tensorcore_count", "num_cores",
                     "core_count"):
            c = getattr(info, attr, None)
            if c:
                cores = int(c)
                break
    except Exception:
        pass
    if cores == 1:
        try:
            d = jax.devices()[0]
            for attr in ("num_cores", "core_count"):
                c = getattr(d, attr, None)
                if c:
                    cores = int(c)
                    break
        except Exception:
            pass
    return vmem, max(1, min(2, cores))


def _pick_block_batch(N, C, HW, itemsize, vmem_cap, cores):
    """Fold batch elements into one grid step to amortize the ~0.35us per-step
    overhead, sized from the chip's actual VMEM capacity."""
    # In-flight VMEM ~= 2x input block + 2x output block (double buffering)
    # plus small f32 temporaries -> budget one block at ~1/8 of capacity
    # (v5e/v6e: 16 MiB, v7x: 8 MiB).
    per_block_budget = max(256 * 1024, vmem_cap // 8)
    bytes_per_elem = max(1, C * HW * itemsize)
    bn = max(1, min(N, per_block_budget // bytes_per_elem))
    bn = min(bn, MAX_BLOCK_BATCH)
    # Only split across TensorCores (v7x) when each core's share is large
    # enough (>= 1 MiB) that the extra grid step's fixed overhead is paid for;
    # single-TC v5e/v6e never split.
    if cores > 1 and N > 1:
        per_core = -(-N // 2)
        if per_core * bytes_per_elem >= (1 << 20):
            bn = min(bn, per_core)
    return bn


# ----------------------------------------------------------------------------
# Pallas kernel.
#   x_ref     : (bn, C, HW)  input tile, HW on lanes
#   dct_t_ref : (HW, NB)     DCT filters, transposed for x @ dct^T pooling
#   w1t_ref   : (NB, Cr, C)  fc1 weights, NB-major, w1t[b] = W1_b^T
#   w2t_ref   : (NB, C, Cr)  fc2 weights, NB-major, w2t[b] = W2_b^T
#   o_ref     : (bn, C, HW)  output tile
# ----------------------------------------------------------------------------
def mbfa_kernel(x_ref, dct_t_ref, w1t_ref, w2t_ref, o_ref):
    bn, C, HW = x_ref.shape
    NB = dct_t_ref.shape[1]

    # (1) Frequency pooling for every (n, c) row and all branches at once:
    #     y2[(n, c), b] = sum_hw x[n, c, hw] * dct[b, hw]  -- one MXU matmul.
    #     x stays in its input dtype (no widened f32 copy of the block); the
    #     MXU accumulates in f32 via preferred_element_type.
    x2d = x_ref[...].reshape(bn * C, HW)            # merge of leading dims
    y2 = jnp.dot(x2d, dct_t_ref[...],
                 preferred_element_type=jnp.float32)            # (bn*C, NB)

    # (2) Excitation MLP on the MXU in "column" orientation.  For each
    #     (batch element n, branch b):
    #        h = relu(W1_b^T @ y_col)   (Cr, 1)
    #        s = sigmoid(W2_b^T @ h)    (C, 1)   -> C stays on sublanes.
    #     bn and NB are small compile-time constants (static unroll).
    w1t = w1t_ref[...]                                          # (NB, Cr, C)
    w2t = w2t_ref[...]                                          # (NB, C, Cr)
    cols = []
    for n in range(bn):
        acc = jnp.zeros((C, 1), jnp.float32)
        for b in range(NB):
            y_nb = y2[n * C:(n + 1) * C, b:b + 1]               # (C, 1)
            h = jnp.dot(w1t[b], y_nb,
                        preferred_element_type=jnp.float32)     # (Cr, 1)
            h = jnp.maximum(h, 0.0)
            s = jnp.dot(w2t[b], h,
                        preferred_element_type=jnp.float32)     # (C, 1)
            acc = acc + jax.nn.sigmoid(s)
        cols.append(acc[None])                                  # (1, C, 1)

    # (3) out = 1/3 * (x*s1 + x*s2 + x*s3) = x * mean_b(s_b):
    #     the (bn, C, 1) scale broadcasts along the HW lanes for free; one VPU
    #     multiply over the re-read input block, in the input dtype.
    scale = jnp.concatenate(cols, axis=0) * (1.0 / NB)          # (bn, C, 1)
    o_ref[...] = (x_ref[...] * scale.astype(x_ref.dtype)).astype(o_ref.dtype)


# ----------------------------------------------------------------------------
# One-time parameter preparation (cache outside the forward call).
#   dct: (NB, H*W); w1: (NB, C, Cr); w2: (NB, Cr, C)   ->  kernel layouts.
# ----------------------------------------------------------------------------
def prepare_params(dct, w1, w2, dtype=jnp.float32):
    dct_t = jnp.asarray(jnp.transpose(dct, (1, 0)), dtype=dtype)      # (HW, NB)
    w1t = jnp.asarray(jnp.transpose(w1, (0, 2, 1)), dtype=dtype)      # (NB, Cr, C)
    w2t = jnp.asarray(jnp.transpose(w2, (0, 2, 1)), dtype=dtype)      # (NB, C, Cr)
    return dct_t, w1t, w2t


def mbfa_forward(x_nchw, dct_t, w1t, w2t):
    """x_nchw: (N, C, H, W); prepared params from prepare_params()."""
    N, C, H, W = x_nchw.shape
    HW = H * W
    NB = dct_t.shape[1]

    x = x_nchw.reshape(N, C, HW)                # free: native NCHW, no transpose

    vmem_cap, cores = _tpu_vmem_and_cores()
    bn = _pick_block_batch(N, C, HW, x.dtype.itemsize, vmem_cap, cores)
    grid = (pl.cdiv(N, bn),)

    out = pl.pallas_call(
        mbfa_kernel,
        out_shape=jax.ShapeDtypeStruct((N, C, HW), x.dtype),
        grid=grid,
        in_specs=[
            pl.BlockSpec((bn, C, HW), lambda i: (i, 0, 0)),
            pl.BlockSpec((HW, NB), lambda i: (0, 0)),
            pl.BlockSpec(w1t.shape, lambda i: (0, 0, 0)),
            pl.BlockSpec(w2t.shape, lambda i: (0, 0, 0)),
        ],
        out_specs=pl.BlockSpec((bn, C, HW), lambda i: (i, 0, 0)),
        compiler_params=pltpu.CompilerParams(
            dimension_semantics=("parallel",),
            vmem_limit_bytes=int(vmem_cap * 3 // 4)),
        # input_output_aliases={0: 0},   # enable in production to donate x's HBM
    )(x, dct_t, w1t, w2t)

    return out.reshape(N, C, H, W)


# ----------------------------------------------------------------------------
# Pure-JAX reference (mirrors the PyTorch forward exactly).
# ----------------------------------------------------------------------------
def reference(x_nchw, dct, w1, w2):
    N, C, H, W = x_nchw.shape
    xf = x_nchw.reshape(N, C, H * W).astype(jnp.float32)
    out = jnp.zeros_like(xf)
    for b in range(NUM_BRANCHES):
        y = jnp.einsum('ncs,s->nc', xf, dct[b])
        h = jnp.maximum(y @ w1[b], 0.0)
        s = jax.nn.sigmoid(h @ w2[b])
        out = out + xf * s[:, :, None]
    return (out / NUM_BRANCHES).reshape(N, C, H, W)


if __name__ == "__main__":
    # Module hyperparameters (small; spatial size must equal (dct_h, dct_w)
    # since the module's forward has no pooling).
    N, C = 2, 16
    dct_h, dct_w = 14, 14
    reduction = 4
    Cr = C // reduction

    # Branch components, scaled exactly as in MultiBranchFrequencyAttentionLayer.
    comps = [(0, 0), (6, 3), (1, 6)]
    comps = [(u * (dct_h // 7), v * (dct_w // 7)) for (u, v) in comps]
    dct = make_dct_filters(dct_h, dct_w, comps)            # (3, H*W)

    # Deterministic parameter init.  nn.Linear stores (out, in); we keep the
    # transposed (y @ W) form as the canonical parameters here.
    key = jax.random.PRNGKey(0)
    k_x, k1, k2 = jax.random.split(key, 3)
    w1 = 0.1 * jax.random.normal(k1, (NUM_BRANCHES, C, Cr), dtype=jnp.float32)
    w2 = 0.1 * jax.random.normal(k2, (NUM_BRANCHES, Cr, C), dtype=jnp.float32)

    x = jax.random.normal(k_x, (N, C, dct_h, dct_w), dtype=jnp.float32)

    # One-time parameter layout prep (not repeated per forward call).
    params = prepare_params(dct, w1, w2, dtype=x.dtype)

    out = jax.block_until_ready(mbfa_forward(x, *params))
    ref = jax.block_until_ready(reference(x, dct, w1, w2))

    assert out.shape == (N, C, dct_h, dct_w)
    np.testing.assert_allclose(np.asarray(out), np.asarray(ref), rtol=1e-4, atol=1e-4)
    print("KERNEL_OK")
</pallas_src>

<mosaic_0001>
module attributes {stable_mosaic.version = 11 : i64} {
  func.func @mbfa_kernel(%arg0: i32, %arg1: memref<2x16x196xf32, #tpu.memory_space<vmem>>, %arg2: memref<196x3xf32, #tpu.memory_space<vmem>>, %arg3: memref<3x4x16xf32, #tpu.memory_space<vmem>>, %arg4: memref<3x16x4xf32, #tpu.memory_space<vmem>>, %arg5: memref<2x16x196xf32, #tpu.memory_space<vmem>>) attributes {dimension_semantics = [#tpu.dimension_semantics<parallel>], iteration_bounds = array<i64: 1>, scalar_prefetch = 0 : i64, scratch_operands = 0 : i64, tpu.core_type = #tpu.core_type<tc>, window_params = [{transform_indices = @transform_0, window_bounds = array<i64: 2, 16, 196>}, {pipeline_mode = #tpu.pipeline_mode<synchronous>, transform_indices = @transform_1, window_bounds = array<i64: 196, 3>}, {pipeline_mode = #tpu.pipeline_mode<synchronous>, transform_indices = @transform_2, window_bounds = array<i64: 3, 4, 16>}, {pipeline_mode = #tpu.pipeline_mode<synchronous>, transform_indices = @transform_3, window_bounds = array<i64: 3, 16, 4>}, {transform_indices = @transform_4, window_bounds = array<i64: 2, 16, 196>}]} {
    %c0 = arith.constant 0 : index
    %c0_0 = arith.constant 0 : index
    %c0_1 = arith.constant 0 : index
    %0 = vector.load %arg1[%c0, %c0_0, %c0_1] : memref<2x16x196xf32, #tpu.memory_space<vmem>>, vector<2x16x196xf32>
    %1 = vector.shape_cast %0 : vector<2x16x196xf32> to vector<32x196xf32>
    %c0_2 = arith.constant 0 : index
    %c0_3 = arith.constant 0 : index
    %2 = vector.load %arg2[%c0_2, %c0_3] : memref<196x3xf32, #tpu.memory_space<vmem>>, vector<196x3xf32>
    %cst = arith.constant dense<0.000000e+00> : vector<32x3xf32>
    %3 = tpu.matmul %1, %2, %cst {dimension_numbers = #tpu.dot_dimension_numbers<[1], [0], [0], [1], [0, 0, 1, 1], [], []>} : vector<32x196xf32>, vector<196x3xf32>, vector<32x3xf32> -> vector<32x3xf32>
    %c0_4 = arith.constant 0 : index
    %c0_5 = arith.constant 0 : index
    %c0_6 = arith.constant 0 : index
    %4 = vector.load %arg3[%c0_4, %c0_5, %c0_6] : memref<3x4x16xf32, #tpu.memory_space<vmem>>, vector<3x4x16xf32>
    %c0_7 = arith.constant 0 : index
    %c0_8 = arith.constant 0 : index
    %c0_9 = arith.constant 0 : index
    %5 = vector.load %arg4[%c0_7, %c0_8, %c0_9] : memref<3x16x4xf32, #tpu.memory_space<vmem>>, vector<3x16x4xf32>
    %cst_10 = arith.constant 0.000000e+00 : f32
    %6 = vector.broadcast %cst_10 : f32 to vector<16x1xf32>
    %7 = vector.extract_strided_slice %3 {offsets = [0, 0], sizes = [16, 1], strides = [1, 1]} : vector<32x3xf32> to vector<16x1xf32>
    %8 = vector.extract_strided_slice %4 {offsets = [0, 0, 0], sizes = [1, 4, 16], strides = [1, 1, 1]} : vector<3x4x16xf32> to vector<1x4x16xf32>
    %9 = vector.shape_cast %8 : vector<1x4x16xf32> to vector<4x16xf32>
    %cst_11 = arith.constant dense<0.000000e+00> : vector<4x1xf32>
    %10 = tpu.matmul %9, %7, %cst_11 {dimension_numbers = #tpu.dot_dimension_numbers<[1], [0], [0], [1], [0, 0, 1, 1], [], []>} : vector<4x16xf32>, vector<16x1xf32>, vector<4x1xf32> -> vector<4x1xf32>
    %cst_12 = arith.constant 0.000000e+00 : f32
    %11 = vector.broadcast %cst_12 : f32 to vector<4x1xf32>
    %12 = arith.maximumf %10, %11 : vector<4x1xf32>
    %13 = vector.extract_strided_slice %5 {offsets = [0, 0, 0], sizes = [1, 16, 4], strides = [1, 1, 1]} : vector<3x16x4xf32> to vector<1x16x4xf32>
    %14 = vector.shape_cast %13 : vector<1x16x4xf32> to vector<16x4xf32>
    %cst_13 = arith.constant dense<0.000000e+00> : vector<16x1xf32>
    %15 = tpu.matmul %14, %12, %cst_13 {dimension_numbers = #tpu.dot_dimension_numbers<[1], [0], [0], [1], [0, 0, 1, 1], [], []>} : vector<16x4xf32>, vector<4x1xf32>, vector<16x1xf32> -> vector<16x1xf32>
    %16 = arith.negf %15 : vector<16x1xf32>
    %17 = math.exp %16 : vector<16x1xf32>
    %cst_14 = arith.constant 1.000000e+00 : f32
    %18 = vector.broadcast %cst_14 : f32 to vector<16x1xf32>
    %19 = arith.addf %18, %17 : vector<16x1xf32>
    %20 = arith.divf %18, %19 : vector<16x1xf32>
    %21 = arith.addf %6, %20 : vector<16x1xf32>
    %22 = vector.extract_strided_slice %3 {offsets = [0, 1], sizes = [16, 1], strides = [1, 1]} : vector<32x3xf32> to vector<16x1xf32>
    %23 = vector.extract_strided_slice %4 {offsets = [1, 0, 0], sizes = [1, 4, 16], strides = [1, 1, 1]} : vector<3x4x16xf32> to vector<1x4x16xf32>
    %24 = vector.shape_cast %23 : vector<1x4x16xf32> to vector<4x16xf32>
    %cst_15 = arith.constant dense<0.000000e+00> : vector<4x1xf32>
    %25 = tpu.matmul %24, %22, %cst_15 {dimension_numbers = #tpu.dot_dimension_numbers<[1], [0], [0], [1], [0, 0, 1, 1], [], []>} : vector<4x16xf32>, vector<16x1xf32>, vector<4x1xf32> -> vector<4x1xf32>
    %cst_16 = arith.constant 0.000000e+00 : f32
    %26 = vector.broadcast %cst_16 : f32 to vector<4x1xf32>
    %27 = arith.maximumf %25, %26 : vector<4x1xf32>
    %28 = vector.extract_strided_slice %5 {offsets = [1, 0, 0], sizes = [1, 16, 4], strides = [1, 1, 1]} : vector<3x16x4xf32> to vector<1x16x4xf32>
    %29 = vector.shape_cast %28 : vector<1x16x4xf32> to vector<16x4xf32>
    %cst_17 = arith.constant dense<0.000000e+00> : vector<16x1xf32>
    %30 = tpu.matmul %29, %27, %cst_17 {dimension_numbers = #tpu.dot_dimension_numbers<[1], [0], [0], [1], [0, 0, 1, 1], [], []>} : vector<16x4xf32>, vector<4x1xf32>, vector<16x1xf32> -> vector<16x1xf32>
    %31 = arith.negf %30 : vector<16x1xf32>
    %32 = math.exp %31 : vector<16x1xf32>
    %cst_18 = arith.constant 1.000000e+00 : f32
    %33 = vector.broadcast %cst_18 : f32 to vector<16x1xf32>
    %34 = arith.addf %33, %32 : vector<16x1xf32>
    %35 = arith.divf %33, %34 : vector<16x1xf32>
    %36 = arith.addf %21, %35 : vector<16x1xf32>
    %37 = vector.extract_strided_slice %3 {offsets = [0, 2], sizes = [16, 1], strides = [1, 1]} : vector<32x3xf32> to vector<16x1xf32>
    %38 = vector.extract_strided_slice %4 {offsets = [2, 0, 0], sizes = [1, 4, 16], strides = [1, 1, 1]} : vector<3x4x16xf32> to vector<1x4x16xf32>
    %39 = vector.shape_cast %38 : vector<1x4x16xf32> to vector<4x16xf32>
    %cst_19 = arith.constant dense<0.000000e+00> : vector<4x1xf32>
    %40 = tpu.matmul %39, %37, %cst_19 {dimension_numbers = #tpu.dot_dimension_numbers<[1], [0], [0], [1], [0, 0, 1, 1], [], []>} : vector<4x16xf32>, vector<16x1xf32>, vector<4x1xf32> -> vector<4x1xf32>
    %cst_20 = arith.constant 0.000000e+00 : f32
    %41 = vector.broadcast %cst_20 : f32 to vector<4x1xf32>
    %42 = arith.maximumf %40, %41 : vector<4x1xf32>
    %43 = vector.extract_strided_slice %5 {offsets = [2, 0, 0], sizes = [1, 16, 4], strides = [1, 1, 1]} : vector<3x16x4xf32> to vector<1x16x4xf32>
    %44 = vector.shape_cast %43 : vector<1x16x4xf32> to vector<16x4xf32>
    %cst_21 = arith.constant dense<0.000000e+00> : vector<16x1xf32>
    %45 = tpu.matmul %44, %42, %cst_21 {dimension_numbers = #tpu.dot_dimension_numbers<[1], [0], [0], [1], [0, 0, 1, 1], [], []>} : vector<16x4xf32>, vector<4x1xf32>, vector<16x1xf32> -> vector<16x1xf32>
    %46 = arith.negf %45 : vector<16x1xf32>
    %47 = math.exp %46 : vector<16x1xf32>
    %cst_22 = arith.constant 1.000000e+00 : f32
    %48 = vector.broadcast %cst_22 : f32 to vector<16x1xf32>
    %49 = arith.addf %48, %47 : vector<16x1xf32>
    %50 = arith.divf %48, %49 : vector<16x1xf32>
    %51 = arith.addf %36, %50 : vector<16x1xf32>
    %52 = vector.shape_cast %51 : vector<16x1xf32> to vector<1x16x1xf32>
    %cst_23 = arith.constant 0.000000e+00 : f32
    %53 = vector.broadcast %cst_23 : f32 to vector<16x1xf32>
    %54 = vector.extract_strided_slice %3 {offsets = [16, 0], sizes = [16, 1], strides = [1, 1]} : vector<32x3xf32> to vector<16x1xf32>
    %55 = vector.extract_strided_slice %4 {offsets = [0, 0, 0], sizes = [1, 4, 16], strides = [1, 1, 1]} : vector<3x4x16xf32> to vector<1x4x16xf32>
    %56 = vector.shape_cast %55 : vector<1x4x16xf32> to vector<4x16xf32>
    %cst_24 = arith.constant dense<0.000000e+00> : vector<4x1xf32>
    %57 = tpu.matmul %56, %54, %cst_24 {dimension_numbers = #tpu.dot_dimension_numbers<[1], [0], [0], [1], [0, 0, 1, 1], [], []>} : vector<4x16xf32>, vector<16x1xf32>, vector<4x1xf32> -> vector<4x1xf32>
    %cst_25 = arith.constant 0.000000e+00 : f32
    %58 = vector.broadcast %cst_25 : f32 to vector<4x1xf32>
    %59 = arith.maximumf %57, %58 : vector<4x1xf32>
    %60 = vector.extract_strided_slice %5 {offsets = [0, 0, 0], sizes = [1, 16, 4], strides = [1, 1, 1]} : vector<3x16x4xf32> to vector<1x16x4xf32>
    %61 = vector.shape_cast %60 : vector<1x16x4xf32> to vector<16x4xf32>
    %cst_26 = arith.constant dense<0.000000e+00> : vector<16x1xf32>
    %62 = tpu.matmul %61, %59, %cst_26 {dimension_numbers = #tpu.dot_dimension_numbers<[1], [0], [0], [1], [0, 0, 1, 1], [], []>} : vector<16x4xf32>, vector<4x1xf32>, vector<16x1xf32> -> vector<16x1xf32>
    %63 = arith.negf %62 : vector<16x1xf32>
    %64 = math.exp %63 : vector<16x1xf32>
    %cst_27 = arith.constant 1.000000e+00 : f32
    %65 = vector.broadcast %cst_27 : f32 to vector<16x1xf32>
    %66 = arith.addf %65, %64 : vector<16x1xf32>
    %67 = arith.divf %65, %66 : vector<16x1xf32>
    %68 = arith.addf %53, %67 : vector<16x1xf32>
    %69 = vector.extract_strided_slice %3 {offsets = [16, 1], sizes = [16, 1], strides = [1, 1]} : vector<32x3xf32> to vector<16x1xf32>
    %70 = vector.extract_strided_slice %4 {offsets = [1, 0, 0], sizes = [1, 4, 16], strides = [1, 1, 1]} : vector<3x4x16xf32> to vector<1x4x16xf32>
    %71 = vector.shape_cast %70 : vector<1x4x16xf32> to vector<4x16xf32>
    %cst_28 = arith.constant dense<0.000000e+00> : vector<4x1xf32>
    %72 = tpu.matmul %71, %69, %cst_28 {dimension_numbers = #tpu.dot_dimension_numbers<[1], [0], [0], [1], [0, 0, 1, 1], [], []>} : vector<4x16xf32>, vector<16x1xf32>, vector<4x1xf32> -> vector<4x1xf32>
    %cst_29 = arith.constant 0.000000e+00 : f32
    %73 = vector.broadcast %cst_29 : f32 to vector<4x1xf32>
    %74 = arith.maximumf %72, %73 : vector<4x1xf32>
    %75 = vector.extract_strided_slice %5 {offsets = [1, 0, 0], sizes = [1, 16, 4], strides = [1, 1, 1]} : vector<3x16x4xf32> to vector<1x16x4xf32>
    %76 = vector.shape_cast %75 : vector<1x16x4xf32> to vector<16x4xf32>
    %cst_30 = arith.constant dense<0.000000e+00> : vector<16x1xf32>
    %77 = tpu.matmul %76, %74, %cst_30 {dimension_numbers = #tpu.dot_dimension_numbers<[1], [0], [0], [1], [0, 0, 1, 1], [], []>} : vector<16x4xf32>, vector<4x1xf32>, vector<16x1xf32> -> vector<16x1xf32>
    %78 = arith.negf %77 : vector<16x1xf32>
    %79 = math.exp %78 : vector<16x1xf32>
    %cst_31 = arith.constant 1.000000e+00 : f32
    %80 = vector.broadcast %cst_31 : f32 to vector<16x1xf32>
    %81 = arith.addf %80, %79 : vector<16x1xf32>
    %82 = arith.divf %80, %81 : vector<16x1xf32>
    %83 = arith.addf %68, %82 : vector<16x1xf32>
    %84 = vector.extract_strided_slice %3 {offsets = [16, 2], sizes = [16, 1], strides = [1, 1]} : vector<32x3xf32> to vector<16x1xf32>
    %85 = vector.extract_strided_slice %4 {offsets = [2, 0, 0], sizes = [1, 4, 16], strides = [1, 1, 1]} : vector<3x4x16xf32> to vector<1x4x16xf32>
    %86 = vector.shape_cast %85 : vector<1x4x16xf32> to vector<4x16xf32>
    %cst_32 = arith.constant dense<0.000000e+00> : vector<4x1xf32>
    %87 = tpu.matmul %86, %84, %cst_32 {dimension_numbers = #tpu.dot_dimension_numbers<[1], [0], [0], [1], [0, 0, 1, 1], [], []>} : vector<4x16xf32>, vector<16x1xf32>, vector<4x1xf32> -> vector<4x1xf32>
    %cst_33 = arith.constant 0.000000e+00 : f32
    %88 = vector.broadcast %cst_33 : f32 to vector<4x1xf32>
    %89 = arith.maximumf %87, %88 : vector<4x1xf32>
    %90 = vector.extract_strided_slice %5 {offsets = [2, 0, 0], sizes = [1, 16, 4], strides = [1, 1, 1]} : vector<3x16x4xf32> to vector<1x16x4xf32>
    %91 = vector.shape_cast %90 : vector<1x16x4xf32> to vector<16x4xf32>
    %cst_34 = arith.constant dense<0.000000e+00> : vector<16x1xf32>
    %92 = tpu.matmul %91, %89, %cst_34 {dimension_numbers = #tpu.dot_dimension_numbers<[1], [0], [0], [1], [0, 0, 1, 1], [], []>} : vector<16x4xf32>, vector<4x1xf32>, vector<16x1xf32> -> vector<16x1xf32>
    %93 = arith.negf %92 : vector<16x1xf32>
    %94 = math.exp %93 : vector<16x1xf32>
    %cst_35 = arith.constant 1.000000e+00 : f32
    %95 = vector.broadcast %cst_35 : f32 to vector<16x1xf32>
    %96 = arith.addf %95, %94 : vector<16x1xf32>
    %97 = arith.divf %95, %96 : vector<16x1xf32>
    %98 = arith.addf %83, %97 : vector<16x1xf32>
    %99 = vector.shape_cast %98 : vector<16x1xf32> to vector<1x16x1xf32>
    %100 = tpu.concatenate %52, %99 in 0 : vector<1x16x1xf32>, vector<1x16x1xf32> -> vector<2x16x1xf32>
    %cst_36 = arith.constant 0.333333343 : f32
    %101 = vector.broadcast %cst_36 : f32 to vector<2x16x1xf32>
    %102 = arith.mulf %100, %101 : vector<2x16x1xf32>
    %c0_37 = arith.constant 0 : index
    %c0_38 = arith.constant 0 : index
    %c0_39 = arith.constant 0 : index
    %103 = vector.load %arg1[%c0_37, %c0_38, %c0_39] : memref<2x16x196xf32, #tpu.memory_space<vmem>>, vector<2x16x196xf32>
    %104 = vector.broadcast %102 : vector<2x16x1xf32> to vector<2x16x196xf32>
    %105 = arith.mulf %103, %104 : vector<2x16x196xf32>
    %c0_40 = arith.constant 0 : index
    %c0_41 = arith.constant 0 : index
    %c0_42 = arith.constant 0 : index
    %106 = vector.load %arg5[%c0_40, %c0_41, %c0_42] : memref<2x16x196xf32, #tpu.memory_space<vmem>>, vector<2x16x196xf32>
    tpu.vector_store %arg5[%c0_40, %c0_41, %c0_42], %105 {strides = array<i32>} : memref<2x16x196xf32, #tpu.memory_space<vmem>>, vector<2x16x196xf32>,
    return
  }
  func.func @transform_0(%arg0: i32) -> (i32, i32, i32) {
    %c0_i32 = arith.constant 0 : i32
    %c0_i32_0 = arith.constant 0 : i32
    %c0_i32_1 = arith.constant 0 : i32
    return %arg0, %c0_i32, %c0_i32_0 : i32, i32, i32
  }
  func.func @transform_1(%arg0: i32) -> (i32, i32) {
    %c0_i32 = arith.constant 0 : i32
    %c0_i32_0 = arith.constant 0 : i32
    %c0_i32_1 = arith.constant 0 : i32
    return %c0_i32, %c0_i32_0 : i32, i32
  }
  func.func @transform_2(%arg0: i32) -> (i32, i32, i32) {
    %c0_i32 = arith.constant 0 : i32
    %c0_i32_0 = arith.constant 0 : i32
    %c0_i32_1 = arith.constant 0 : i32
    %c0_i32_2 = arith.constant 0 : i32
    return %c0_i32, %c0_i32_0, %c0_i32_1 : i32, i32, i32
  }
  func.func @transform_3(%arg0: i32) -> (i32, i32, i32) {
    %c0_i32 = arith.constant 0 : i32
    %c0_i32_0 = arith.constant 0 : i32
    %c0_i32_1 = arith.constant 0 : i32
    %c0_i32_2 = arith.constant 0 : i32
    return %c0_i32, %c0_i32_0, %c0_i32_1 : i32, i32, i32
  }
  func.func @transform_4(%arg0: i32) -> (i32, i32, i32) {
    %c0_i32 = arith.constant 0 : i32
    %c0_i32_0 = arith.constant 0 : i32
    %c0_i32_1 = arith.constant 0 : i32
    return %arg0, %c0_i32, %c0_i32_0 : i32, i32, i32
  }
}

</mosaic_0001>

<llo_original>
// kernel: tpu_custom_call.1
$region0: #{tpu_custom_call.1}
  #allocation0 [shape = 'u32[]', space=smem, size = 0x4, offset = 0x4, fixed_abs, tag = 'smem constant byte address 0x4 - core index']
  #allocation1 [shape = 'u32[72,128]{1,0:T(1,128)}', space=vmem, size = 0x9000, scoped, tag = 'internal scratch']
  %s0 = inlined_call_operand.vmem [shape: f32[2,16,196], index: 0, kind: input, shape index: {}]
  %s1 = inlined_call_operand.vmem [shape: f32[196,3], index: 1, kind: input, shape index: {}]
  %s2 = inlined_call_operand.vmem [shape: f32[3,4,16], index: 2, kind: input, shape index: {}]
  %s3 = inlined_call_operand.vmem [shape: f32[3,16,4], index: 3, kind: input, shape index: {}]
  %s4 = inlined_call_operand.hbm [shape: f32[2,16,196], index: 4, kind: output, shape index: {}]
  %s5 = sld [smem:[#allocation0]]
  $region26: #{tpu_custom_call.1} parent=0
    _
  %s7 = ssub.s32 1, %s5
  %s8 = scalar_select 0, %s7, %s5
  $region1: #{tpu_custom_call.1} parent=0
    #allocation2 [shape = 'u8[32768]{0}', space=vmem, size = 0x8000, scoped, tag = 'output window, operand 0, single buffered']
    #allocation3 [shape = 's32[1]{0}', space=sflag, size = 0x4, scoped, tag = 'scoped memory for tpu_custom_call.1']
    %9 = vsyncpa [#allocation3], 0
    // Predicated region
    $region2: #{tpu_custom_call.1} parent=1 // pred_check
      _
    $region3: #{tpu_custom_call.1} parent=1 // pred_check_branch
      %11 = sbr.rel (0) target = $region5
    $region4: #{tpu_custom_call.1} parent=1 // pred_region
      _
    $region5: #{tpu_custom_call.1} parent=1 // pred_fallthru
      _
    // Predicated region
    $region6: #{tpu_custom_call.1} parent=1 // pred_check
      _
    $region7: #{tpu_custom_call.1} parent=1 // pred_check_branch
      %13 = sbr.rel (0) target = $region9
    $region8: #{tpu_custom_call.1} parent=1 // pred_region
      _
    $region9: #{tpu_custom_call.1} parent=1 // pred_fallthru
      _
    // Predicated region
    $region10: #{tpu_custom_call.1} parent=1 // pred_check
      _
    $region11: #{tpu_custom_call.1} parent=1 // pred_check_branch
      %15 = sbr.rel (0) target = $region13
    $region12: #{tpu_custom_call.1} parent=1 // pred_region
      _
    $region13: #{tpu_custom_call.1} parent=1 // pred_fallthru
      _
    // Predicated region
    $region14: #{tpu_custom_call.1} parent=1 // pred_check
      _
    $region15: #{tpu_custom_call.1} parent=1 // pred_check_branch
      %17 = sbr.rel (0) target = $region17
    $region16: #{tpu_custom_call.1} parent=1 // pred_region
      _
    $region17: #{tpu_custom_call.1} parent=1 // pred_fallthru
      _
    %v18 = vld [vmem:[%s0] sm:$0xff]
    %v19 = vld [vmem:[%s0 + $0x8] sm:$0xff]
    %v20 = vld [vmem:[%s0 + $0x10] sm:$0xff]
    %v21 = vld [vmem:[%s0 + $0x18] sm:$0xff]
    %v22 = vld [vmem:[%s0 + $0x20] sm:$0xff]
    %v23 = vld [vmem:[%s0 + $0x28] sm:$0xff]
    %v24 = vld [vmem:[%s0 + $0x30] sm:$0xff]
    %v25 = vld [vmem:[%s0 + $0x38] sm:$0xff]
    %v26 = vld [vmem:[%s1] sm:$0xff]
    %v27 = vld [vmem:[%s1 + $0x8] sm:$0xff]
    %v28 = vld [vmem:[%s1 + $0x10] sm:$0xff]
    %v29 = vld [vmem:[%s1 + $0x18] sm:$0xff]
    %v30 = vld [vmem:[%s1 + $0x20] sm:$0xff]
    %v31 = vld [vmem:[%s1 + $0x28] sm:$0xff]
    %v32 = vld [vmem:[%s1 + $0x30] sm:$0xff]
    %v33 = vld [vmem:[%s1 + $0x38] sm:$0xff]
    %v34 = vld [vmem:[%s1 + $0x40] sm:$0xff]
    %v35 = vld [vmem:[%s1 + $0x48] sm:$0xff]
    %v36 = vld [vmem:[%s1 + $0x50] sm:$0xff]
    %v37 = vld [vmem:[%s1 + $0x58] sm:$0xff]
    %v38 = vld [vmem:[%s1 + $0x60] sm:$0xff]
    %v39 = vld [vmem:[%s1 + $0x68] sm:$0xff]
    %v40 = vld [vmem:[%s1 + $0x70] sm:$0xff]
    %v41 = vld [vmem:[%s1 + $0x78] sm:$0xff]
    %v42 = vld [vmem:[%s1 + $0x80] sm:$0xff]
    %v43 = vld [vmem:[%s1 + $0x88] sm:$0xff]
    %v44 = vld [vmem:[%s1 + $0x90] sm:$0xff]
    %v45 = vld [vmem:[%s1 + $0x98] sm:$0xff]
    %v46 = vld [vmem:[%s1 + $0xa0] sm:$0xff]
    %v47 = vld [vmem:[%s1 + $0xa8] sm:$0xff]
    %v48 = vld [vmem:[%s1 + $0xb0] sm:$0xff]
    %v49 = vld [vmem:[%s1 + $0xb8] sm:$0xff]
    %v50 = vld [vmem:[%s1 + $0xc0] sm:$0xf]
    %vm51 = vcmask 556032
    %v53 = vsel %vm51, %v19, 0
    %v56 = vsel %vm51, %v21, 0
    %v59 = vsel %vm51, %v23, 0
    %v62 = vsel %vm51, %v25, 0
    %vm64 = vcmask 1043456
    %v66 = vsel %vm64, %v50, 0
    %68 = vmatpush.msra.mxu0 %v41
    %69 = vmatpush.msra.mxu0 %v40
    %70 = vmatpush.msra.mxu0 %v39
    %71 = vmatpush.msra.mxu0 %v38
    %72 = vmatpush.msra.mxu0 %v37
    %73 = vmatpush.msra.mxu0 %v36
    %74 = vmatpush.msra.mxu0 %v35
    %75 = vmatpush.msra.mxu0 %v34
    %76 = vmatpush.msra.mxu0 %v33
    %77 = vmatpush.msra.mxu0 %v32
    %78 = vmatpush.msra.mxu0 %v31
    %79 = vmatpush.msra.mxu0 %v30
    %80 = vmatpush.msra.mxu0 %v29
    %81 = vmatpush.msra.mxu0 %v28
    %82 = vmatpush.msra.mxu0 %v27
    %83 = vmatpush.msra.mxu0 %v26
    %84 = vmatmul.f32.gmra.mxu0 %v18
    %v85 = vpop.f32.mrf.mxu0
    %v86 = vadd.f32 0.0, %v85
    %87 = vmatmul.f32.gmra.mxu0 %v20
    %v88 = vpop.f32.mrf.mxu0
    %v89 = vadd.f32 0.0, %v88
    %90 = vmatmul.f32.gmra.mxu0 %v22
    %v91 = vpop.f32.mrf.mxu0
    %v92 = vadd.f32 0.0, %v91
    %93 = vmatmul.f32.gmra.mxu0 %v24
    %v94 = vpop.f32.mrf.mxu0
    %v95 = vadd.f32 0.0, %v94
    %96 = vdwg.mxu0
    %97 = vmatpush.msra.mxu0 0.0
    %98 = vmatpush.msra.mxu0 0.0
    %99 = vmatpush.msra.mxu0 0.0
    %100 = vmatpush.msra.mxu0 0.0
    %101 = vmatpush.msra.mxu0 0.0
    %102 = vmatpush.msra.mxu0 0.0
    %103 = vmatpush.msra.mxu0 0.0
    %104 = vmatpush.msra.mxu0 %v66
    %105 = vmatpush.msra.mxu0 %v49
    %106 = vmatpush.msra.mxu0 %v48
    %107 = vmatpush.msra.mxu0 %v47
    %108 = vmatpush.msra.mxu0 %v46
    %109 = vmatpush.msra.mxu0 %v45
    %110 = vmatpush.msra.mxu0 %v44
    %111 = vmatpush.msra.mxu0 %v43
    %112 = vmatpush.msra.mxu0 %v42
    %113 = vmatmul.f32.gmra.mxu0 %v53
    %v114 = vpop.f32.mrf.mxu0
    %v115 = vadd.f32 %v86, %v114
    %116 = vmatmul.f32.gmra.mxu0 %v56
    %v117 = vpop.f32.mrf.mxu0
    %v118 = vadd.f32 %v89, %v117
    %119 = vmatmul.f32.gmra.mxu0 %v59
    %v120 = vpop.f32.mrf.mxu0
    %v121 = vadd.f32 %v92, %v120
    %122 = vmatmul.f32.gmra.mxu0 %v62
    %v123 = vpop.f32.mrf.mxu0
    %v124 = vadd.f32 %v95, %v123
    %125 = vdwg.mxu0
    %v126 = vld [vmem:[%s2] sm:$0xf]
    %v127 = vld [vmem:[%s2 + $0x4] sm:$0xf]
    %v128 = vld [vmem:[%s2 + $0x8] sm:$0xf]
    %v129 = vld [vmem:[%s3] sm:$0xff]
    %v130 = vld [vmem:[%s3 + $0x8] sm:$0xff]
    %v131 = vld [vmem:[%s3 + $0x10] sm:$0xff]
    %v132 = vld [vmem:[%s3 + $0x18] sm:$0xff]
    %v133 = vld [vmem:[%s3 + $0x20] sm:$0xff]
    %v134 = vld [vmem:[%s3 + $0x28] sm:$0xff]
    %vm135 = vcmask 130048
    %v137 = vsel %vm135, %v126, 0
    %139 = vmatpush.msra.mxu0 0.0
    %140 = vmatpush.msra.mxu0 0.0
    %141 = vmatpush.msra.mxu0 0.0
    %142 = vmatpush.msra.mxu0 0.0
    %143 = vmatpush.msra.mxu0 0.0
    %144 = vmatpush.msra.mxu0 0.0
    %145 = vmatpush.msra.mxu0 0.0
    %146 = vmatpush.msra.mxu0 0.0
    %147 = vmatpush.msra.mxu0 0.0
    %148 = vmatpush.msra.mxu0 0.0
    %149 = vmatpush.msra.mxu0 0.0
    %150 = vmatpush.msra.mxu0 0.0
    %151 = vmatpush.msra.mxu0 0.0
    %152 = vmatpush.msra.mxu0 0.0
    %153 = vmatpush.msra.mxu0 %v118
    %154 = vmatpush.msra.mxu0 %v115
    %155 = vmatmul.f32.gmra.mxu0 %v137
    %v156 = vpop.f32.mrf.mxu0
    %v157 = vadd.f32 0.0, %v156
    %158 = vdwg.mxu0
    %v159 = vmax.f32 %v157, 0.0
    %vm160 = vcmask 31744
    %v162 = vsel %vm160, %v129, 0
    %v165 = vsel %vm160, %v130, 0
    %v168 = vsel %vm64, %v159, 0
    %170 = vmatpush.msra.mxu0 0.0
    %171 = vmatpush.msra.mxu0 0.0
    %172 = vmatpush.msra.mxu0 0.0
    %173 = vmatpush.msra.mxu0 0.0
    %174 = vmatpush.msra.mxu0 0.0
    %175 = vmatpush.msra.mxu0 0.0
    %176 = vmatpush.msra.mxu0 0.0
    %177 = vmatpush.msra.mxu0 0.0
    %178 = vmatpush.msra.mxu0 0.0
    %179 = vmatpush.msra.mxu0 0.0
    %180 = vmatpush.msra.mxu0 0.0
    %181 = vmatpush.msra.mxu0 0.0
    %182 = vmatpush.msra.mxu0 0.0
    %183 = vmatpush.msra.mxu0 0.0
    %184 = vmatpush.msra.mxu0 0.0
    %185 = vmatpush.msra.mxu0 %v168
    %186 = vmatmul.f32.gmra.mxu0 %v162
    %v187 = vpop.f32.mrf.mxu0
    %v188 = vadd.f32 0.0, %v187
    %189 = vmatmul.f32.gmra.mxu0 %v165
    %v190 = vpop.f32.mrf.mxu0
    %v191 = vadd.f32 0.0, %v190
    %192 = vdwg.mxu0
    %v193 = vxor.u32 %v188, 2147483648
    %v194 = vxor.u32 %v191, 2147483648
    %v195 = vmul.f32 %v193, 1.442695
    %v196 = vpow.pop %v195
    %v197 = vmul.f32 %v194, 1.442695
    %v198 = vpow.pop %v197
    %v199 = vadd.f32 %v196, 1.0
    %v200 = vadd.f32 %v198, 1.0
    %v201 = vrcp.pop %v199
    %v202 = vmul.f32 %v199, %v201
    %v203 = vsub.f32 1.0, %v202
    %v204 = vmul.f32 %v201, %v203
    %v205 = vadd.f32 %v201, %v204
    %vm206 = vweird.f32 %v199
    %vm207 = vweird.f32 %v201
    %vm208 = vmor %vm206, %vm207
    %v209 = vsel %vm208, %v201, %v205
    %v210 = vand.u32 2147483647, %v199
    %vm211 = vcmp.eq.f32.partialorder %v210, 8.507059e+37
    %v212 = vand.u32 %v199, 2147483648
    %v213 = vor.u32 1.1754944e-38, %v212
    %v214 = vsel %vm211, %v213, %v209
    %v215 = vmul.f32 1.0, %v214
    %v216 = vrcp.pop %v200
    %v217 = vmul.f32 %v200, %v216
    %v218 = vsub.f32 1.0, %v217
    %v219 = vmul.f32 %v216, %v218
    %v220 = vadd.f32 %v216, %v219
    %vm221 = vweird.f32 %v200
    %vm222 = vweird.f32 %v216
    %vm223 = vmor %vm221, %vm222
    %v224 = vsel %vm223, %v216, %v220
    %v225 = vand.u32 2147483647, %v200
    %vm226 = vcmp.eq.f32.partialorder %v225, 8.507059e+37
    %v227 = vand.u32 %v200, 2147483648
    %v228 = vor.u32 1.1754944e-38, %v227
    %v229 = vsel %vm226, %v228, %v224
    %v230 = vmul.f32 1.0, %v229
    %v231 = vadd.f32 %v215, 0.0
    %v232 = vadd.f32 %v230, 0.0
    %235 = vrot.lane.b32.xlu0 %v115, 127
    %v236 = vpop.permute.xlu0 %235
    %237 = vrot.lane.b32.xlu0 %v118, 127
    %v238 = vpop.permute.xlu0 %237
    %v242 = vsel %vm135, %v127, 0
    %244 = vmatpush.msra.mxu0 0.0
    %245 = vmatpush.msra.mxu0 0.0
    %246 = vmatpush.msra.mxu0 0.0
    %247 = vmatpush.msra.mxu0 0.0
    %248 = vmatpush.msra.mxu0 0.0
    %249 = vmatpush.msra.mxu0 0.0
    %250 = vmatpush.msra.mxu0 0.0
    %251 = vmatpush.msra.mxu0 0.0
    %252 = vmatpush.msra.mxu0 0.0
    %253 = vmatpush.msra.mxu0 0.0
    %254 = vmatpush.msra.mxu0 0.0
    %255 = vmatpush.msra.mxu0 0.0
    %256 = vmatpush.msra.mxu0 0.0
    %257 = vmatpush.msra.mxu0 0.0
    %258 = vmatpush.msra.mxu0 %v238
    %259 = vmatpush.msra.mxu0 %v236
    %260 = vmatmul.f32.gmra.mxu0 %v242
    %v261 = vpop.f32.mrf.mxu0
    %v262 = vadd.f32 0.0, %v261
    %263 = vdwg.mxu0
    %v264 = vmax.f32 %v262, 0.0
    %v266 = vsel %vm160, %v131, 0
    %v269 = vsel %vm160, %v132, 0
    %v272 = vsel %vm64, %v264, 0
    %274 = vmatpush.msra.mxu0 0.0
    %275 = vmatpush.msra.mxu0 0.0
    %276 = vmatpush.msra.mxu0 0.0
    %277 = vmatpush.msra.mxu0 0.0
    %278 = vmatpush.msra.mxu0 0.0
    %279 = vmatpush.msra.mxu0 0.0
    %280 = vmatpush.msra.mxu0 0.0
    %281 = vmatpush.msra.mxu0 0.0
    %282 = vmatpush.msra.mxu0 0.0
    %283 = vmatpush.msra.mxu0 0.0
    %284 = vmatpush.msra.mxu0 0.0
    %285 = vmatpush.msra.mxu0 0.0
    %286 = vmatpush.msra.mxu0 0.0
    %287 = vmatpush.msra.mxu0 0.0
    %288 = vmatpush.msra.mxu0 0.0
    %289 = vmatpush.msra.mxu0 %v272
    %290 = vmatmul.f32.gmra.mxu0 %v266
    %v291 = vpop.f32.mrf.mxu0
    %v292 = vadd.f32 0.0, %v291
    %293 = vmatmul.f32.gmra.mxu0 %v269
    %v294 = vpop.f32.mrf.mxu0
    %v295 = vadd.f32 0.0, %v294
    %296 = vdwg.mxu0
    %v297 = vxor.u32 %v292, 2147483648
    %v298 = vxor.u32 %v295, 2147483648
    %v299 = vmul.f32 %v297, 1.442695
    %v300 = vpow.pop %v299
    %v301 = vmul.f32 %v298, 1.442695
    %v302 = vpow.pop %v301
    %v303 = vadd.f32 %v300, 1.0
    %v304 = vadd.f32 %v302, 1.0
    %v305 = vrcp.pop %v303
    %v306 = vmul.f32 %v303, %v305
    %v307 = vsub.f32 1.0, %v306
    %v308 = vmul.f32 %v305, %v307
    %v309 = vadd.f32 %v305, %v308
    %vm310 = vweird.f32 %v303
    %vm311 = vweird.f32 %v305
    %vm312 = vmor %vm310, %vm311
    %v313 = vsel %vm312, %v305, %v309
    %v314 = vand.u32 2147483647, %v303
    %vm315 = vcmp.eq.f32.partialorder %v314, 8.507059e+37
    %v316 = vand.u32 %v303, 2147483648
    %v317 = vor.u32 1.1754944e-38, %v316
    %v318 = vsel %vm315, %v317, %v313
    %v319 = vmul.f32 1.0, %v318
    %v320 = vrcp.pop %v304
    %v321 = vmul.f32 %v304, %v320
    %v322 = vsub.f32 1.0, %v321
    %v323 = vmul.f32 %v320, %v322
    %v324 = vadd.f32 %v320, %v323
    %vm325 = vweird.f32 %v304
    %vm326 = vweird.f32 %v320
    %vm327 = vmor %vm325, %vm326
    %v328 = vsel %vm327, %v320, %v324
    %v329 = vand.u32 2147483647, %v304
    %vm330 = vcmp.eq.f32.partialorder %v329, 8.507059e+37
    %v331 = vand.u32 %v304, 2147483648
    %v332 = vor.u32 1.1754944e-38, %v331
    %v333 = vsel %vm330, %v332, %v328
    %v334 = vmul.f32 1.0, %v333
    %v335 = vadd.f32 %v231, %v319
    %v336 = vadd.f32 %v232, %v334
    %337 = vrot.lane.b32.xlu0 %v115, 126
    %v338 = vpop.permute.xlu0 %337
    %339 = vrot.lane.b32.xlu0 %v118, 126
    %v340 = vpop.permute.xlu0 %339
    %v344 = vsel %vm135, %v128, 0
    %346 = vmatpush.msra.mxu0 0.0
    %347 = vmatpush.msra.mxu0 0.0
    %348 = vmatpush.msra.mxu0 0.0
    %349 = vmatpush.msra.mxu0 0.0
    %350 = vmatpush.msra.mxu0 0.0
    %351 = vmatpush.msra.mxu0 0.0
    %352 = vmatpush.msra.mxu0 0.0
    %353 = vmatpush.msra.mxu0 0.0
    %354 = vmatpush.msra.mxu0 0.0
    %355 = vmatpush.msra.mxu0 0.0
    %356 = vmatpush.msra.mxu0 0.0
    %357 = vmatpush.msra.mxu0 0.0
    %358 = vmatpush.msra.mxu0 0.0
    %359 = vmatpush.msra.mxu0 0.0
    %360 = vmatpush.msra.mxu0 %v340
    %361 = vmatpush.msra.mxu0 %v338
    %362 = vmatmul.f32.gmra.mxu0 %v344
    %v363 = vpop.f32.mrf.mxu0
    %v364 = vadd.f32 0.0, %v363
    %365 = vdwg.mxu0
    %v366 = vmax.f32 %v364, 0.0
    %v368 = vsel %vm160, %v133, 0
    %v371 = vsel %vm160, %v134, 0
    %v374 = vsel %vm64, %v366, 0
    %376 = vmatpush.msra.mxu0 0.0
    %377 = vmatpush.msra.mxu0 0.0
    %378 = vmatpush.msra.mxu0 0.0
    %379 = vmatpush.msra.mxu0 0.0
    %380 = vmatpush.msra.mxu0 0.0
    %381 = vmatpush.msra.mxu0 0.0
    %382 = vmatpush.msra.mxu0 0.0
    %383 = vmatpush.msra.mxu0 0.0
    %384 = vmatpush.msra.mxu0 0.0
    %385 = vmatpush.msra.mxu0 0.0
    %386 = vmatpush.msra.mxu0 0.0
    %387 = vmatpush.msra.mxu0 0.0
    %388 = vmatpush.msra.mxu0 0.0
    %389 = vmatpush.msra.mxu0 0.0
    %390 = vmatpush.msra.mxu0 0.0
    %391 = vmatpush.msra.mxu0 %v374
    %392 = vmatmul.f32.gmra.mxu0 %v368
    %v393 = vpop.f32.mrf.mxu0
    %v394 = vadd.f32 0.0, %v393
    %395 = vmatmul.f32.gmra.mxu0 %v371
    %v396 = vpop.f32.mrf.mxu0
    %v397 = vadd.f32 0.0, %v396
    %398 = vdwg.mxu0
    %v399 = vxor.u32 %v394, 2147483648
    %v400 = vxor.u32 %v397, 2147483648
    %v401 = vmul.f32 %v399, 1.442695
    %v402 = vpow.pop %v401
    %v403 = vmul.f32 %v400, 1.442695
    %v404 = vpow.pop %v403
    %v405 = vadd.f32 %v402, 1.0
    %v406 = vadd.f32 %v404, 1.0
    %v407 = vrcp.pop %v405
    %v408 = vmul.f32 %v405, %v407
    %v409 = vsub.f32 1.0, %v408
    %v410 = vmul.f32 %v407, %v409
    %v411 = vadd.f32 %v407, %v410
    %vm412 = vweird.f32 %v405
    %vm413 = vweird.f32 %v407
    %vm414 = vmor %vm412, %vm413
    %v415 = vsel %vm414, %v407, %v411
    %v416 = vand.u32 2147483647, %v405
    %vm417 = vcmp.eq.f32.partialorder %v416, 8.507059e+37
    %v418 = vand.u32 %v405, 2147483648
    %v419 = vor.u32 1.1754944e-38, %v418
    %v420 = vsel %vm417, %v419, %v415
    %v421 = vmul.f32 1.0, %v420
    %v422 = vrcp.pop %v406
    %v423 = vmul.f32 %v406, %v422
    %v424 = vsub.f32 1.0, %v423
    %v425 = vmul.f32 %v422, %v424
    %v426 = vadd.f32 %v422, %v425
    %vm427 = vweird.f32 %v406
    %vm428 = vweird.f32 %v422
    %vm429 = vmor %vm427, %vm428
    %v430 = vsel %vm429, %v422, %v426
    %v431 = vand.u32 2147483647, %v406
    %vm432 = vcmp.eq.f32.partialorder %v431, 8.507059e+37
    %v433 = vand.u32 %v406, 2147483648
    %v434 = vor.u32 1.1754944e-38, %v433
    %v435 = vsel %vm432, %v434, %v430
    %v436 = vmul.f32 1.0, %v435
    %v437 = vadd.f32 %v335, %v421
    %v438 = vadd.f32 %v336, %v436
    %439 = vmatpush.msra.mxu0 0.0
    %440 = vmatpush.msra.mxu0 0.0
    %441 = vmatpush.msra.mxu0 0.0
    %442 = vmatpush.msra.mxu0 0.0
    %443 = vmatpush.msra.mxu0 0.0
    %444 = vmatpush.msra.mxu0 0.0
    %445 = vmatpush.msra.mxu0 0.0
    %446 = vmatpush.msra.mxu0 0.0
    %447 = vmatpush.msra.mxu0 0.0
    %448 = vmatpush.msra.mxu0 0.0
    %449 = vmatpush.msra.mxu0 0.0
    %450 = vmatpush.msra.mxu0 0.0
    %451 = vmatpush.msra.mxu0 0.0
    %452 = vmatpush.msra.mxu0 0.0
    %453 = vmatpush.msra.mxu0 %v124
    %454 = vmatpush.msra.mxu0 %v121
    %455 = vmatmul.f32.gmra.mxu0 %v137
    %v456 = vpop.f32.mrf.mxu0
    %v457 = vadd.f32 0.0, %v456
    %458 = vdwg.mxu0
    %v459 = vmax.f32 %v457, 0.0
    %v461 = vsel %vm64, %v459, 0
    %463 = vmatpush.msra.mxu0 0.0
    %464 = vmatpush.msra.mxu0 0.0
    %465 = vmatpush.msra.mxu0 0.0
    %466 = vmatpush.msra.mxu0 0.0
    %467 = vmatpush.msra.mxu0 0.0
    %468 = vmatpush.msra.mxu0 0.0
    %469 = vmatpush.msra.mxu0 0.0
    %470 = vmatpush.msra.mxu0 0.0
    %471 = vmatpush.msra.mxu0 0.0
    %472 = vmatpush.msra.mxu0 0.0
    %473 = vmatpush.msra.mxu0 0.0
    %474 = vmatpush.msra.mxu0 0.0
    %475 = vmatpush.msra.mxu0 0.0
    %476 = vmatpush.msra.mxu0 0.0
    %477 = vmatpush.msra.mxu0 0.0
    %478 = vmatpush.msra.mxu0 %v461
    %479 = vmatmul.f32.gmra.mxu0 %v162
    %v480 = vpop.f32.mrf.mxu0
    %v481 = vadd.f32 0.0, %v480
    %482 = vmatmul.f32.gmra.mxu0 %v165
    %v483 = vpop.f32.mrf.mxu0
    %v484 = vadd.f32 0.0, %v483
    %485 = vdwg.mxu0
    %v486 = vxor.u32 %v481, 2147483648
    %v487 = vxor.u32 %v484, 2147483648
    %v488 = vmul.f32 %v486, 1.442695
    %v489 = vpow.pop %v488
    %v490 = vmul.f32 %v487, 1.442695
    %v491 = vpow.pop %v490
    %v492 = vadd.f32 %v489, 1.0
    %v493 = vadd.f32 %v491, 1.0
    %v494 = vrcp.pop %v492
    %v495 = vmul.f32 %v492, %v494
    %v496 = vsub.f32 1.0, %v495
    %v497 = vmul.f32 %v494, %v496
    %v498 = vadd.f32 %v494, %v497
    %vm499 = vweird.f32 %v492
    %vm500 = vweird.f32 %v494
    %vm501 = vmor %vm499, %vm500
    %v502 = vsel %vm501, %v494, %v498
    %v503 = vand.u32 2147483647, %v492
    %vm504 = vcmp.eq.f32.partialorder %v503, 8.507059e+37
    %v505 = vand.u32 %v492, 2147483648
    %v506 = vor.u32 1.1754944e-38, %v505
    %v507 = vsel %vm504, %v506, %v502
    %v508 = vmul.f32 1.0, %v507
    %v509 = vrcp.pop %v493
    %v510 = vmul.f32 %v493, %v509
    %v511 = vsub.f32 1.0, %v510
    %v512 = vmul.f32 %v509, %v511
    %v513 = vadd.f32 %v509, %v512
    %vm514 = vweird.f32 %v493
    %vm515 = vweird.f32 %v509
    %vm516 = vmor %vm514, %vm515
    %v517 = vsel %vm516, %v509, %v513
    %v518 = vand.u32 2147483647, %v493
    %vm519 = vcmp.eq.f32.partialorder %v518, 8.507059e+37
    %v520 = vand.u32 %v493, 2147483648
    %v521 = vor.u32 1.1754944e-38, %v520
    %v522 = vsel %vm519, %v521, %v517
    %v523 = vmul.f32 1.0, %v522
    %v524 = vadd.f32 %v508, 0.0
    %v525 = vadd.f32 %v523, 0.0
    %528 = vrot.lane.b32.xlu0 %v121, 127
    %v529 = vpop.permute.xlu0 %528
    %530 = vrot.lane.b32.xlu0 %v124, 127
    %v531 = vpop.permute.xlu0 %530
    %534 = vmatpush.msra.mxu0 0.0
    %535 = vmatpush.msra.mxu0 0.0
    %536 = vmatpush.msra.mxu0 0.0
    %537 = vmatpush.msra.mxu0 0.0
    %538 = vmatpush.msra.mxu0 0.0
    %539 = vmatpush.msra.mxu0 0.0
    %540 = vmatpush.msra.mxu0 0.0
    %541 = vmatpush.msra.mxu0 0.0
    %542 = vmatpush.msra.mxu0 0.0
    %543 = vmatpush.msra.mxu0 0.0
    %544 = vmatpush.msra.mxu0 0.0
    %545 = vmatpush.msra.mxu0 0.0
    %546 = vmatpush.msra.mxu0 0.0
    %547 = vmatpush.msra.mxu0 0.0
    %548 = vmatpush.msra.mxu0 %v531
    %549 = vmatpush.msra.mxu0 %v529
    %550 = vmatmul.f32.gmra.mxu0 %v242
    %v551 = vpop.f32.mrf.mxu0
    %v552 = vadd.f32 0.0, %v551
    %553 = vdwg.mxu0
    %v554 = vmax.f32 %v552, 0.0
    %v556 = vsel %vm64, %v554, 0
    %558 = vmatpush.msra.mxu0 0.0
    %559 = vmatpush.msra.mxu0 0.0
    %560 = vmatpush.msra.mxu0 0.0
    %561 = vmatpush.msra.mxu0 0.0
    %562 = vmatpush.msra.mxu0 0.0
    %563 = vmatpush.msra.mxu0 0.0
    %564 = vmatpush.msra.mxu0 0.0
    %565 = vmatpush.msra.mxu0 0.0
    %566 = vmatpush.msra.mxu0 0.0
    %567 = vmatpush.msra.mxu0 0.0
    %568 = vmatpush.msra.mxu0 0.0
    %569 = vmatpush.msra.mxu0 0.0
    %570 = vmatpush.msra.mxu0 0.0
    %571 = vmatpush.msra.mxu0 0.0
    %572 = vmatpush.msra.mxu0 0.0
    %573 = vmatpush.msra.mxu0 %v556
    %574 = vmatmul.f32.gmra.mxu0 %v266
    %v575 = vpop.f32.mrf.mxu0
    %v576 = vadd.f32 0.0, %v575
    %577 = vmatmul.f32.gmra.mxu0 %v269
    %v578 = vpop.f32.mrf.mxu0
    %v579 = vadd.f32 0.0, %v578
    %580 = vdwg.mxu0
    %v581 = vxor.u32 %v576, 2147483648
    %v582 = vxor.u32 %v579, 2147483648
    %v583 = vmul.f32 %v581, 1.442695
    %v584 = vpow.pop %v583
    %v585 = vmul.f32 %v582, 1.442695
    %v586 = vpow.pop %v585
    %v587 = vadd.f32 %v584, 1.0
    %v588 = vadd.f32 %v586, 1.0
    %v589 = vrcp.pop %v587
    %v590 = vmul.f32 %v587, %v589
    %v591 = vsub.f32 1.0, %v590
    %v592 = vmul.f32 %v589, %v591
    %v593 = vadd.f32 %v589, %v592
    %vm594 = vweird.f32 %v587
    %vm595 = vweird.f32 %v589
    %vm596 = vmor %vm594, %vm595
    %v597 = vsel %vm596, %v589, %v593
    %v598 = vand.u32 2147483647, %v587
    %vm599 = vcmp.eq.f32.partialorder %v598, 8.507059e+37
    %v600 = vand.u32 %v587, 2147483648
    %v601 = vor.u32 1.1754944e-38, %v600
    %v602 = vsel %vm599, %v601, %v597
    %v603 = vmul.f32 1.0, %v602
    %v604 = vrcp.pop %v588
    %v605 = vmul.f32 %v588, %v604
    %v606 = vsub.f32 1.0, %v605
    %v607 = vmul.f32 %v604, %v606
    %v608 = vadd.f32 %v604, %v607
    %vm609 = vweird.f32 %v588
    %vm610 = vweird.f32 %v604
    %vm611 = vmor %vm609, %vm610
    %v612 = vsel %vm611, %v604, %v608
    %v613 = vand.u32 2147483647, %v588
    %vm614 = vcmp.eq.f32.partialorder %v613, 8.507059e+37
    %v615 = vand.u32 %v588, 2147483648
    %v616 = vor.u32 1.1754944e-38, %v615
    %v617 = vsel %vm614, %v616, %v612
    %v618 = vmul.f32 1.0, %v617
    %v619 = vadd.f32 %v524, %v603
    %v620 = vadd.f32 %v525, %v618
    %621 = vrot.lane.b32.xlu0 %v121, 126
    %v622 = vpop.permute.xlu0 %621
    %623 = vrot.lane.b32.xlu0 %v124, 126
    %v624 = vpop.permute.xlu0 %623
    %627 = vmatpush.msra.mxu0 0.0
    %628 = vmatpush.msra.mxu0 0.0
    %629 = vmatpush.msra.mxu0 0.0
    %630 = vmatpush.msra.mxu0 0.0
    %631 = vmatpush.msra.mxu0 0.0
    %632 = vmatpush.msra.mxu0 0.0
    %633 = vmatpush.msra.mxu0 0.0
    %634 = vmatpush.msra.mxu0 0.0
    %635 = vmatpush.msra.mxu0 0.0
    %636 = vmatpush.msra.mxu0 0.0
    %637 = vmatpush.msra.mxu0 0.0
    %638 = vmatpush.msra.mxu0 0.0
    %639 = vmatpush.msra.mxu0 0.0
    %640 = vmatpush.msra.mxu0 0.0
    %641 = vmatpush.msra.mxu0 %v624
    %642 = vmatpush.msra.mxu0 %v622
    %643 = vmatmul.f32.gmra.mxu0 %v344
    %v644 = vpop.f32.mrf.mxu0
    %v645 = vadd.f32 0.0, %v644
    %646 = vdwg.mxu0
    %v647 = vmax.f32 %v645, 0.0
    %v649 = vsel %vm64, %v647, 0
    %651 = vmatpush.msra.mxu0 0.0
    %652 = vmatpush.msra.mxu0 0.0
    %653 = vmatpush.msra.mxu0 0.0
    %654 = vmatpush.msra.mxu0 0.0
    %655 = vmatpush.msra.mxu0 0.0
    %656 = vmatpush.msra.mxu0 0.0
    %657 = vmatpush.msra.mxu0 0.0
    %658 = vmatpush.msra.mxu0 0.0
    %659 = vmatpush.msra.mxu0 0.0
    %660 = vmatpush.msra.mxu0 0.0
    %661 = vmatpush.msra.mxu0 0.0
    %662 = vmatpush.msra.mxu0 0.0
    %663 = vmatpush.msra.mxu0 0.0
    %664 = vmatpush.msra.mxu0 0.0
    %665 = vmatpush.msra.mxu0 0.0
    %666 = vmatpush.msra.mxu0 %v649
    %667 = vmatmul.f32.gmra.mxu0 %v368
    %v668 = vpop.f32.mrf.mxu0
    %v669 = vadd.f32 0.0, %v668
    %670 = vmatmul.f32.gmra.mxu0 %v371
    %v671 = vpop.f32.mrf.mxu0
    %v672 = vadd.f32 0.0, %v671
    %673 = vdwg.mxu0
    %v674 = vxor.u32 %v669, 2147483648
    %v675 = vxor.u32 %v672, 2147483648
    %v676 = vmul.f32 %v674, 1.442695
    %v677 = vpow.pop %v676
    %v678 = vmul.f32 %v675, 1.442695
    %v679 = vpow.pop %v678
    %v680 = vadd.f32 %v677, 1.0
    %v681 = vadd.f32 %v679, 1.0
    %v682 = vrcp.pop %v680
    %v683 = vmul.f32 %v680, %v682
    %v684 = vsub.f32 1.0, %v683
    %v685 = vmul.f32 %v682, %v684
    %v686 = vadd.f32 %v682, %v685
    %vm687 = vweird.f32 %v680
    %vm688 = vweird.f32 %v682
    %vm689 = vmor %vm687, %vm688
    %v690 = vsel %vm689, %v682, %v686
    %v691 = vand.u32 2147483647, %v680
    %vm692 = vcmp.eq.f32.partialorder %v691, 8.507059e+37
    %v693 = vand.u32 %v680, 2147483648
    %v694 = vor.u32 1.1754944e-38, %v693
    %v695 = vsel %vm692, %v694, %v690
    %v696 = vmul.f32 1.0, %v695
    %v697 = vrcp.pop %v681
    %v698 = vmul.f32 %v681, %v697
    %v699 = vsub.f32 1.0, %v698
    %v700 = vmul.f32 %v697, %v699
    %v701 = vadd.f32 %v697, %v700
    %vm702 = vweird.f32 %v681
    %vm703 = vweird.f32 %v697
    %vm704 = vmor %vm702, %vm703
    %v705 = vsel %vm704, %v697, %v701
    %v706 = vand.u32 2147483647, %v681
    %vm707 = vcmp.eq.f32.partialorder %v706, 8.507059e+37
    %v708 = vand.u32 %v681, 2147483648
    %v709 = vor.u32 1.1754944e-38, %v708
    %v710 = vsel %vm707, %v709, %v705
    %v711 = vmul.f32 1.0, %v710
    %v712 = vadd.f32 %v619, %v696
    %v713 = vadd.f32 %v620, %v711
    %v714 = vmul.f32 %v437, 0.33333334
    %v715 = vmul.f32 %v438, 0.33333334
    %v716 = vmul.f32 %v712, 0.33333334
    %v717 = vmul.f32 %v713, 0.33333334
    %719 = vset.pattern.permute.xlu0 0
    %720 = vperm.xlu0 %719, %v714
    %v721 = vpop.permute.xlu0 %720
    %724 = vset.pattern.permute.xlu0 0
    %725 = vperm.xlu0 %724, %v715
    %v726 = vpop.permute.xlu0 %725
    %729 = vset.pattern.permute.xlu0 0
    %730 = vperm.xlu0 %729, %v716
    %v731 = vpop.permute.xlu0 %730
    %734 = vset.pattern.permute.xlu0 0
    %735 = vperm.xlu0 %734, %v717
    %v736 = vpop.permute.xlu0 %735
    %v738 = vmul.f32 %v18, %v721
    %v739 = vmul.f32 %v19, %v721
    %v740 = vmul.f32 %v20, %v726
    %v741 = vmul.f32 %v21, %v726
    %v742 = vmul.f32 %v22, %v731
    %v743 = vmul.f32 %v23, %v731
    %v744 = vmul.f32 %v24, %v736
    %v745 = vmul.f32 %v25, %v736
    %746 = vst [vmem:[#allocation2] sm:$0xff] %v738
    %747 = vst.msk [vmem:[#allocation2 + $0x8] sm:$0xff] %vm51, %v739
    %748 = vst [vmem:[#allocation2 + $0x10] sm:$0xff] %v740
    %749 = vst.msk [vmem:[#allocation2 + $0x18] sm:$0xff] %vm51, %v741
    %750 = vst [vmem:[#allocation2 + $0x20] sm:$0xff] %v742
    %751 = vst.msk [vmem:[#allocation2 + $0x28] sm:$0xff] %vm51, %v743
    %752 = vst [vmem:[#allocation2 + $0x30] sm:$0xff] %v744
    %753 = vst.msk [vmem:[#allocation2 + $0x38] sm:$0xff] %vm51, %v745
    // Predicated region
    $region18: #{tpu_custom_call.1} parent=1 // pred_check
      _
    $region19: #{tpu_custom_call.1} parent=1 // pred_check_branch
      %755 = sbr.rel (0) target = $region21
    $region20: #{tpu_custom_call.1} parent=1 // pred_region
      %757 = vsyncadd [#allocation3], 0
      %s758 = sshll.u32 [#allocation2], 4
      %s759 = int_to_ptr.vmem [resolvable:$true] %s758
      %s760 = sshll.u32 %s4, 4
      %s761 = int_to_ptr.hbm [resolvable:$true] %s760
      %766 = dma.vmem_to_hbm [thread:$0]  %s759, 1024, %s761, [#allocation3], 256, 256, 16
    $region21: #{tpu_custom_call.1} parent=1 // pred_fallthru
      _
    // Predicated region
    $region22: #{tpu_custom_call.1} parent=1 // pred_check
      _
    $region23: #{tpu_custom_call.1} parent=1 // pred_check_branch
      %768 = sbr.rel (0) target = $region25
    $region24: #{tpu_custom_call.1} parent=1 // pred_region
      %770 = dma.done [#allocation3], 1024
    $region25: #{tpu_custom_call.1} parent=1 // pred_fallthru
      _
    %771 = vsyncpa [#allocation3], 1

</llo_original>
